<compile_context>
chip_gen: v5e
topology: v5e:2x2
jax: 0.10.0
libtpu: 0.0.40
codegen_flags: <defaults>
</compile_context>

<pallas_src>
import math

import jax
import jax.numpy as jnp
from jax.experimental import pallas as pl
from jax.experimental.pallas import tpu as pltpu

ALPHA = 2           # module defaults; exponents hard-coded as multiplies below
BETA = 4
LANE = 128
ROW_TILE = 2048     # rows per input tile (tuning knob; 1 MiB f32 per input)
NSPLIT = 2          # leading "parallel" grid axis (uses both TCs on v7x)
ACC_ROWS = 8        # per-half accumulator block is (ACC_ROWS, LANE)


def _cdiv(a, b):
    return -(-a // b)


def _round_down(x, m):
    return (x // m) * m


def _focal_partials(pred2d, targ2d, n_valid, row_tile):
    """Per-half partial sums of positive_loss / negative_loss / num_positive.

    Returns three (NSPLIT*ACC_ROWS, LANE) f32 arrays whose full sums equal the
    corresponding whole-tensor reductions of the PyTorch module.
    """
    rows, cols = pred2d.shape
    assert cols == LANE and row_tile % ACC_ROWS == 0
    r_blocks = _cdiv(rows, row_tile)          # static
    half_blocks = _cdiv(r_blocks, NSPLIT)     # static: blocks per parallel half

    def in_index_map(i, k):
        # Nominal block is i*half_blocks + k; clamp so the DMA never starts
        # past the array.  A clamped (duplicate) block contributes zero
        # because its nominal global indices fail the validity mask below.
        return (jnp.minimum(i * half_blocks + k, r_blocks - 1), 0)

    def kernel(pred_ref, targ_ref, pos_ref, neg_ref, npos_ref):
        i = pl.program_id(0)
        k = pl.program_id(1)

        # The output blocks stay resident across the whole k (reduction) axis:
        # zero once, then accumulate VPU-only partial sums every step.
        @pl.when(k == 0)
        def _():
            pos_ref[...] = jnp.zeros_like(pos_ref)
            neg_ref[...] = jnp.zeros_like(neg_ref)
            npos_ref[...] = jnp.zeros_like(npos_ref)

        pred = pred_ref[...].astype(jnp.float32)
        targ = targ_ref[...].astype(jnp.float32)

        # Global flat element index of each element of this (nominal) tile:
        # masks lane padding, partial edge blocks and clamped duplicate
        # blocks.  int32 is fine for < 2**31 elements.
        blk = i * half_blocks + k
        row_ids = jax.lax.broadcasted_iota(jnp.int32, (row_tile, LANE), 0)
        col_ids = jax.lax.broadcasted_iota(jnp.int32, (row_tile, LANE), 1)
        flat = (blk * row_tile + row_ids) * LANE + col_ids
        valid = flat < n_valid
        validf = valid.astype(jnp.float32)

        # Sanitize masked elements *before* the logs (out-of-bounds tile data
        # is unspecified and could contain NaN/Inf).
        pred_s = jnp.where(valid, pred, 0.5)
        targ_s = jnp.where(valid, targ, 0.0)

        positive_index = (targ_s == 1.0).astype(jnp.float32) * validf
        # Keep the explicit lt(1) compare so exact torch semantics hold even
        # for out-of-range targets; it is one cheap VPU compare per vreg.
        negative_index = (targ_s < 1.0).astype(jnp.float32) * validf

        pred_c = jnp.maximum(pred_s, 1e-12)   # torch.clamp(prediction, 1e-12)
        one_m_t = 1.0 - targ_s
        omt2 = one_m_t * one_m_t
        negative_weights = omt2 * omt2        # (1 - t)^4      (beta = 4)
        one_m_p = 1.0 - pred_c
        pos_pow = one_m_p * one_m_p           # (1 - p)^2      (alpha = 2)
        neg_pow = pred_c * pred_c             # p^2

        positive_loss = jnp.log(pred_c) * pos_pow * positive_index
        negative_loss = (jnp.log(one_m_p + 1e-05) * neg_pow
                         * negative_weights * negative_index)

        def fold(x):
            # (row_tile, LANE) -> (ACC_ROWS, LANE): adds across whole vregs
            # only (pure VPU); the cross-lane reduce happens in the wrapper.
            return jnp.sum(x.reshape(row_tile // ACC_ROWS, ACC_ROWS, LANE),
                           axis=0)

        pos_ref[...] += fold(positive_loss)
        neg_ref[...] += fold(negative_loss)
        npos_ref[...] += fold(positive_index)

    acc_shape = jax.ShapeDtypeStruct((NSPLIT * ACC_ROWS, LANE), jnp.float32)
    acc_spec = pl.BlockSpec((ACC_ROWS, LANE), lambda i, k: (i, 0))
    in_spec = pl.BlockSpec((row_tile, LANE), in_index_map)

    n_elems = rows * LANE
    bytes_accessed = int(pred2d.size * pred2d.dtype.itemsize
                         + targ2d.size * targ2d.dtype.itemsize
                         + 3 * NSPLIT * ACC_ROWS * LANE * 4)

    return pl.pallas_call(
        kernel,
        out_shape=(acc_shape, acc_shape, acc_shape),
        grid_spec=pltpu.PrefetchScalarGridSpec(
            num_scalar_prefetch=0,
            grid=(NSPLIT, half_blocks),
            in_specs=[in_spec, in_spec],
            out_specs=[acc_spec, acc_spec, acc_spec],
        ),
        compiler_params=pltpu.CompilerParams(
            dimension_semantics=("parallel", "arbitrary"),
            vmem_limit_bytes=32 * 1024 * 1024,
        ),
        cost_estimate=pl.CostEstimate(
            flops=16 * n_elems,
            transcendentals=2 * n_elems,
            bytes_accessed=bytes_accessed,
        ),
    )(pred2d, targ2d)


def focal_loss(prediction, target):
    """JAX/Pallas equivalent of FocalLoss.forward (any shape, NCHW typical)."""
    pred = jnp.asarray(prediction).reshape(-1)   # keep native dtype (e.g. bf16)
    targ = jnp.asarray(target).reshape(-1)
    n = pred.shape[0]

    lane_pad = (-n) % LANE
    if lane_pad:
        # Rare path (numel not a multiple of 128): minimal pad so the flat
        # tensor views as a lane-dense [rows, 128] slab.  Pad content is
        # irrelevant — it is masked inside the kernel.
        pred = jnp.pad(pred, (0, lane_pad))
        targ = jnp.pad(targ, (0, lane_pad))
    rows = (n + lane_pad) // LANE
    pred2d = pred.reshape(rows, LANE)
    targ2d = targ.reshape(rows, LANE)

    # Largest row tile that applies, snapped to the 8-sublane grain.
    row_tile = min(ROW_TILE, max(ACC_ROWS, _round_down(rows, ACC_ROWS)))

    pos_p, neg_p, npos_p = _focal_partials(pred2d, targ2d, n, row_tile)
    positive_loss = jnp.sum(pos_p)
    negative_loss = jnp.sum(neg_p)
    num_positive = jnp.sum(npos_p)

    # Branching from the PyTorch forward, expressed with jnp.where (traceable).
    neg_bad = jnp.isnan(negative_loss) | jnp.isinf(negative_loss)
    safe_npos = jnp.where(num_positive == 0, 1.0, num_positive)

    loss_no_pos = -negative_loss
    loss_bad_neg = -positive_loss / safe_npos
    loss_normal = -(positive_loss + negative_loss) / safe_npos

    loss = jnp.where(
        num_positive == 0,
        loss_no_pos,
        jnp.where(neg_bad, loss_bad_neg, loss_normal),
    )
    # TODO(synk): the PyTorch non-finite-loss branch saves debug PNGs and
    # prints diagnostics (host-side file I/O); no Pallas/JAX equivalent.
    return loss


def focal_loss_ref(prediction, target):
    """Pure-JAX reference (mirrors the PyTorch module) for validation."""
    pred = jnp.maximum(prediction.astype(jnp.float32), 1e-12)
    targ = target.astype(jnp.float32)
    pos_idx = (targ == 1.0).astype(jnp.float32)
    neg_idx = (targ < 1.0).astype(jnp.float32)
    neg_w = jnp.power(1.0 - targ, BETA)
    pos_loss = jnp.sum(jnp.log(pred) * jnp.power(1.0 - pred, ALPHA) * pos_idx)
    neg_loss = jnp.sum(
        jnp.log(1.0 - pred + 1e-05) * jnp.power(pred, ALPHA) * neg_w * neg_idx)
    num_pos = jnp.sum(pos_idx)
    safe = jnp.where(num_pos == 0, 1.0, num_pos)
    return jnp.where(num_pos == 0, -neg_loss, -(pos_loss + neg_loss) / safe)


def _check(pred, targ):
    out = jax.block_until_ready(focal_loss(pred, targ))
    ref = jax.block_until_ready(focal_loss_ref(pred, targ))
    assert math.isfinite(float(out)), "loss not finite"
    tol = 1e-3 * max(1.0, abs(float(ref)))
    assert abs(float(out) - float(ref)) <= tol, (float(out), float(ref))
    return out


if __name__ == "__main__":
    key = jax.random.PRNGKey(0)
    k1, k2, k3, k4 = jax.random.split(key, 4)

    # Case 1: NCHW heatmaps like the PyTorch module (exercises the 2-way
    # parallel split; the second half is a fully-masked clamped block here).
    B, C, H, W = 2, 4, 16, 16
    prediction = jax.random.uniform(k1, (B, C, H, W), jnp.float32, 1e-4, 0.999)
    target = jax.random.uniform(k2, (B, C, H, W), jnp.float32, 0.0, 0.95)
    target = target.at[:, :, 8, 8].set(1.0)
    target = target.at[0, 1, 3, 5].set(1.0)
    _check(prediction, target)

    # Case 2: numel not a multiple of 128 and rows not a multiple of the row
    # tile -> exercises the in-kernel tail masking on a partial edge block.
    B2, C2, H2, W2 = 1, 5, 17, 17
    pred2 = jax.random.uniform(k3, (B2, C2, H2, W2), jnp.float32, 1e-4, 0.999)
    targ2 = jax.random.uniform(k4, (B2, C2, H2, W2), jnp.float32, 0.0, 0.95)
    targ2 = targ2.at[:, :, 9, 9].set(1.0)
    _check(pred2, targ2)

    print("KERNEL_OK")
</pallas_src>

<mosaic_0001>
module attributes {stable_mosaic.version = 11 : i64} {
  func.func @kernel(%arg0: i32, %arg1: i32, %arg2: memref<16x128xf32, #tpu.memory_space<vmem>>, %arg3: memref<16x128xf32, #tpu.memory_space<vmem>>, %arg4: memref<8x128xf32, #tpu.memory_space<vmem>>, %arg5: memref<8x128xf32, #tpu.memory_space<vmem>>, %arg6: memref<8x128xf32, #tpu.memory_space<vmem>>) attributes {dimension_semantics = [#tpu.dimension_semantics<parallel>, #tpu.dimension_semantics<arbitrary>], iteration_bounds = array<i64: 2, 1>, scalar_prefetch = 0 : i64, scratch_operands = 0 : i64, tpu.core_type = #tpu.core_type<tc>, window_params = [{transform_indices = @transform_0, window_bounds = array<i64: 16, 128>}, {transform_indices = @transform_1, window_bounds = array<i64: 16, 128>}, {transform_indices = @transform_2, window_bounds = array<i64: 8, 128>}, {transform_indices = @transform_3, window_bounds = array<i64: 8, 128>}, {transform_indices = @transform_4, window_bounds = array<i64: 8, 128>}]} {
    %c0_i32 = arith.constant 0 : i32
    %0 = arith.cmpi eq, %arg1, %c0_i32 : i32
    %1 = arith.extui %0 : i1 to i32
    %c0_i32_0 = arith.constant 0 : i32
    %2 = arith.cmpi ne, %1, %c0_i32_0 : i32
    scf.if %2 {
      %cst_26 = arith.constant 0.000000e+00 : f32
      %67 = vector.broadcast %cst_26 : f32 to vector<8x128xf32>
      %c0_27 = arith.constant 0 : index
      %c0_28 = arith.constant 0 : index
      %68 = vector.load %arg4[%c0_27, %c0_28] : memref<8x128xf32, #tpu.memory_space<vmem>>, vector<8x128xf32>
      tpu.vector_store %arg4[%c0_27, %c0_28], %67 {strides = array<i32>} : memref<8x128xf32, #tpu.memory_space<vmem>>, vector<8x128xf32>,
      %cst_29 = arith.constant 0.000000e+00 : f32
      %69 = vector.broadcast %cst_29 : f32 to vector<8x128xf32>
      %c0_30 = arith.constant 0 : index
      %c0_31 = arith.constant 0 : index
      %70 = vector.load %arg5[%c0_30, %c0_31] : memref<8x128xf32, #tpu.memory_space<vmem>>, vector<8x128xf32>
      tpu.vector_store %arg5[%c0_30, %c0_31], %69 {strides = array<i32>} : memref<8x128xf32, #tpu.memory_space<vmem>>, vector<8x128xf32>,
      %cst_32 = arith.constant 0.000000e+00 : f32
      %71 = vector.broadcast %cst_32 : f32 to vector<8x128xf32>
      %c0_33 = arith.constant 0 : index
      %c0_34 = arith.constant 0 : index
      %72 = vector.load %arg6[%c0_33, %c0_34] : memref<8x128xf32, #tpu.memory_space<vmem>>, vector<8x128xf32>
      tpu.vector_store %arg6[%c0_33, %c0_34], %71 {strides = array<i32>} : memref<8x128xf32, #tpu.memory_space<vmem>>, vector<8x128xf32>,
    } else {
    }
    %c0 = arith.constant 0 : index
    %c0_1 = arith.constant 0 : index
    %3 = vector.load %arg2[%c0, %c0_1] : memref<16x128xf32, #tpu.memory_space<vmem>>, vector<16x128xf32>
    %c0_2 = arith.constant 0 : index
    %c0_3 = arith.constant 0 : index
    %4 = vector.load %arg3[%c0_2, %c0_3] : memref<16x128xf32, #tpu.memory_space<vmem>>, vector<16x128xf32>
    %c1_i32 = arith.constant 1 : i32
    %5 = arith.muli %arg0, %c1_i32 : i32
    %6 = arith.addi %5, %arg1 : i32
    %7 = tpu.iota {dimensions = array<i32: 0>} : vector<16x128xi32>
    %8 = tpu.iota {dimensions = array<i32: 1>} : vector<16x128xi32>
    %c16_i32 = arith.constant 16 : i32
    %9 = arith.muli %6, %c16_i32 : i32
    %10 = vector.broadcast %9 : i32 to vector<16x128xi32>
    %11 = arith.addi %10, %7 : vector<16x128xi32>
    %c128_i32 = arith.constant 128 : i32
    %12 = vector.broadcast %c128_i32 : i32 to vector<16x128xi32>
    %13 = arith.muli %11, %12 : vector<16x128xi32>
    %14 = arith.addi %13, %8 : vector<16x128xi32>
    %c2048_i32 = arith.constant 2048 : i32
    %15 = vector.broadcast %c2048_i32 : i32 to vector<16x128xi32>
    %16 = arith.cmpi slt, %14, %15 : vector<16x128xi32>
    %17 = arith.extui %16 : vector<16x128xi1> to vector<16x128xi32>
    %18 = arith.sitofp %17 : vector<16x128xi32> to vector<16x128xf32>
    %cst = arith.constant 5.000000e-01 : f32
    %19 = vector.broadcast %cst : f32 to vector<16x128xf32>
    %20 = arith.select %16, %3, %19 : vector<16x128xi1>, vector<16x128xf32>
    %cst_4 = arith.constant 0.000000e+00 : f32
    %21 = vector.broadcast %cst_4 : f32 to vector<16x128xf32>
    %22 = arith.select %16, %4, %21 : vector<16x128xi1>, vector<16x128xf32>
    %cst_5 = arith.constant 1.000000e+00 : f32
    %23 = vector.broadcast %cst_5 : f32 to vector<16x128xf32>
    %24 = arith.cmpf oeq, %22, %23 : vector<16x128xf32>
    %25 = arith.extui %24 : vector<16x128xi1> to vector<16x128xi32>
    %26 = arith.sitofp %25 : vector<16x128xi32> to vector<16x128xf32>
    %27 = arith.mulf %26, %18 : vector<16x128xf32>
    %cst_6 = arith.constant 1.000000e+00 : f32
    %28 = vector.broadcast %cst_6 : f32 to vector<16x128xf32>
    %29 = arith.cmpf olt, %22, %28 : vector<16x128xf32>
    %30 = arith.extui %29 : vector<16x128xi1> to vector<16x128xi32>
    %31 = arith.sitofp %30 : vector<16x128xi32> to vector<16x128xf32>
    %32 = arith.mulf %31, %18 : vector<16x128xf32>
    %cst_7 = arith.constant 9.99999996E-13 : f32
    %33 = vector.broadcast %cst_7 : f32 to vector<16x128xf32>
    %34 = arith.maximumf %20, %33 : vector<16x128xf32>
    %cst_8 = arith.constant 1.000000e+00 : f32
    %35 = vector.broadcast %cst_8 : f32 to vector<16x128xf32>
    %36 = arith.subf %35, %22 : vector<16x128xf32>
    %37 = arith.mulf %36, %36 : vector<16x128xf32>
    %38 = arith.mulf %37, %37 : vector<16x128xf32>
    %cst_9 = arith.constant 1.000000e+00 : f32
    %39 = vector.broadcast %cst_9 : f32 to vector<16x128xf32>
    %40 = arith.subf %39, %34 : vector<16x128xf32>
    %41 = arith.mulf %40, %40 : vector<16x128xf32>
    %42 = arith.mulf %34, %34 : vector<16x128xf32>
    %43 = math.log %34 : vector<16x128xf32>
    %44 = arith.mulf %43, %41 : vector<16x128xf32>
    %45 = arith.mulf %44, %27 : vector<16x128xf32>
    %cst_10 = arith.constant 9.99999974E-6 : f32
    %46 = vector.broadcast %cst_10 : f32 to vector<16x128xf32>
    %47 = arith.addf %40, %46 : vector<16x128xf32>
    %48 = math.log %47 : vector<16x128xf32>
    %49 = arith.mulf %48, %42 : vector<16x128xf32>
    %50 = arith.mulf %49, %38 : vector<16x128xf32>
    %51 = arith.mulf %50, %32 : vector<16x128xf32>
    %c0_11 = arith.constant 0 : index
    %c0_12 = arith.constant 0 : index
    %52 = vector.load %arg4[%c0_11, %c0_12] : memref<8x128xf32, #tpu.memory_space<vmem>>, vector<8x128xf32>
    %53 = vector.shape_cast %45 : vector<16x128xf32> to vector<2x8x128xf32>
    %cst_13 = arith.constant dense<0.000000e+00> : vector<8x128xf32>
    %54 = vector.multi_reduction <add>, %53, %cst_13 [0] : vector<2x8x128xf32> to vector<8x128xf32>
    %55 = arith.addf %52, %54 : vector<8x128xf32>
    %c0_14 = arith.constant 0 : index
    %c0_15 = arith.constant 0 : index
    %56 = vector.load %arg4[%c0_14, %c0_15] : memref<8x128xf32, #tpu.memory_space<vmem>>, vector<8x128xf32>
    tpu.vector_store %arg4[%c0_14, %c0_15], %55 {strides = array<i32>} : memref<8x128xf32, #tpu.memory_space<vmem>>, vector<8x128xf32>,
    %c0_16 = arith.constant 0 : index
    %c0_17 = arith.constant 0 : index
    %57 = vector.load %arg5[%c0_16, %c0_17] : memref<8x128xf32, #tpu.memory_space<vmem>>, vector<8x128xf32>
    %58 = vector.shape_cast %51 : vector<16x128xf32> to vector<2x8x128xf32>
    %cst_18 = arith.constant dense<0.000000e+00> : vector<8x128xf32>
    %59 = vector.multi_reduction <add>, %58, %cst_18 [0] : vector<2x8x128xf32> to vector<8x128xf32>
    %60 = arith.addf %57, %59 : vector<8x128xf32>
    %c0_19 = arith.constant 0 : index
    %c0_20 = arith.constant 0 : index
    %61 = vector.load %arg5[%c0_19, %c0_20] : memref<8x128xf32, #tpu.memory_space<vmem>>, vector<8x128xf32>
    tpu.vector_store %arg5[%c0_19, %c0_20], %60 {strides = array<i32>} : memref<8x128xf32, #tpu.memory_space<vmem>>, vector<8x128xf32>,
    %c0_21 = arith.constant 0 : index
    %c0_22 = arith.constant 0 : index
    %62 = vector.load %arg6[%c0_21, %c0_22] : memref<8x128xf32, #tpu.memory_space<vmem>>, vector<8x128xf32>
    %63 = vector.shape_cast %27 : vector<16x128xf32> to vector<2x8x128xf32>
    %cst_23 = arith.constant dense<0.000000e+00> : vector<8x128xf32>
    %64 = vector.multi_reduction <add>, %63, %cst_23 [0] : vector<2x8x128xf32> to vector<8x128xf32>
    %65 = arith.addf %62, %64 : vector<8x128xf32>
    %c0_24 = arith.constant 0 : index
    %c0_25 = arith.constant 0 : index
    %66 = vector.load %arg6[%c0_24, %c0_25] : memref<8x128xf32, #tpu.memory_space<vmem>>, vector<8x128xf32>
    tpu.vector_store %arg6[%c0_24, %c0_25], %65 {strides = array<i32>} : memref<8x128xf32, #tpu.memory_space<vmem>>, vector<8x128xf32>,
    return
  }
  func.func @transform_0(%arg0: i32, %arg1: i32) -> (i32, i32) {
    %c1_i32 = arith.constant 1 : i32
    %0 = arith.muli %arg0, %c1_i32 : i32
    %1 = arith.addi %0, %arg1 : i32
    %c0_i32 = arith.constant 0 : i32
    %2 = arith.minsi %1, %c0_i32 : i32
    %c0_i32_0 = arith.constant 0 : i32
    %c0_i32_1 = arith.constant 0 : i32
    return %2, %c0_i32_0 : i32, i32
  }
  func.func @transform_1(%arg0: i32, %arg1: i32) -> (i32, i32) {
    %c1_i32 = arith.constant 1 : i32
    %0 = arith.muli %arg0, %c1_i32 : i32
    %1 = arith.addi %0, %arg1 : i32
    %c0_i32 = arith.constant 0 : i32
    %2 = arith.minsi %1, %c0_i32 : i32
    %c0_i32_0 = arith.constant 0 : i32
    %c0_i32_1 = arith.constant 0 : i32
    return %2, %c0_i32_0 : i32, i32
  }
  func.func @transform_2(%arg0: i32, %arg1: i32) -> (i32, i32) {
    %c0_i32 = arith.constant 0 : i32
    %c0_i32_0 = arith.constant 0 : i32
    return %arg0, %c0_i32 : i32, i32
  }
  func.func @transform_3(%arg0: i32, %arg1: i32) -> (i32, i32) {
    %c0_i32 = arith.constant 0 : i32
    %c0_i32_0 = arith.constant 0 : i32
    return %arg0, %c0_i32 : i32, i32
  }
  func.func @transform_4(%arg0: i32, %arg1: i32) -> (i32, i32) {
    %c0_i32 = arith.constant 0 : i32
    %c0_i32_0 = arith.constant 0 : i32
    return %arg0, %c0_i32 : i32, i32
  }
}

</mosaic_0001>

<llo_original>
// kernel: tpu_custom_call.1
$region0: #{tpu_custom_call.1}
  #allocation0 [shape = 'u32[]', space=smem, size = 0x4, offset = 0x4, fixed_abs, tag = 'smem constant byte address 0x4 - core index']
  #allocation1 [shape = 'u32[72,128]{1,0:T(1,128)}', space=vmem, size = 0x9000, scoped, tag = 'internal scratch']
  %s0 = inlined_call_operand.hbm [shape: f32[16,128], index: 0, kind: input, shape index: {}]
  %s1 = inlined_call_operand.hbm [shape: f32[16,128], index: 1, kind: input, shape index: {}]
  %s2 = inlined_call_operand.hbm [shape: f32[16,128], index: 2, kind: output, shape index: {0}]
  %s3 = inlined_call_operand.hbm [shape: f32[16,128], index: 3, kind: output, shape index: {1}]
  %s4 = inlined_call_operand.hbm [shape: f32[16,128], index: 4, kind: output, shape index: {2}]
  %5 = xla_tuple %s2, %s3, %s4
  %s6 = sld [smem:[#allocation0]]
  $region69: #{tpu_custom_call.1} parent=0
    _
  %s8 = ssub.s32 1, %s6
  %s9 = scalar_select 0, %s8, %s6
  $region1: #{tpu_custom_call.1} parent=0
    #allocation2 [shape = 'u8[16384]{0}', space=vmem, size = 0x4000, scoped, tag = 'input window, operand 0']
    #allocation3 [shape = 's32[2]{0}', space=sflag, size = 0x8, scoped, tag = 'scoped memory for tpu_custom_call.1']
    #allocation4 [shape = 's32[2]{0}', space=sflag, size = 0x8, scoped, tag = 'scoped memory for tpu_custom_call.1']
    #allocation5 [shape = 'u8[16384]{0}', space=vmem, size = 0x4000, scoped, tag = 'input window, operand 1']
    #allocation6 [shape = 's32[2]{0}', space=sflag, size = 0x8, scoped, tag = 'scoped memory for tpu_custom_call.1']
    #allocation7 [shape = 'u8[8192]{0}', space=vmem, size = 0x2000, scoped, tag = 'output window, operand 0']
    #allocation8 [shape = 'u8[8192]{0}', space=vmem, size = 0x2000, scoped, tag = 'output window, operand 1']
    #allocation9 [shape = 's32[2]{0}', space=sflag, size = 0x8, scoped, tag = 'scoped memory for tpu_custom_call.1']
    #allocation10 [shape = 'u8[8192]{0}', space=vmem, size = 0x2000, scoped, tag = 'output window, operand 2']
    %10 = vsyncpa [#allocation3], 0
    %s11 = scalar_lea.sflag [#allocation3], 1
    %12 = vsyncpa %s11, 0
    %13 = vsyncpa [#allocation6], 0
    %s14 = scalar_lea.sflag [#allocation6], 1
    %15 = vsyncpa %s14, 0
    %16 = vsyncpa [#allocation4], 0
    %s17 = scalar_lea.sflag [#allocation4], 1
    %18 = vsyncpa %s17, 0
    %19 = vsyncpa [#allocation9], 0
    %s20 = scalar_lea.sflag [#allocation9], 1
    %21 = vsyncpa %s20, 0
    loop: start=0, step=1, limit=4
    $region2: #{tpu_custom_call.1} parent=1 // loop_pre_header
      _
    $region3: #{tpu_custom_call.1} parent=1 // loop_header
      %s23 = sphi 0, %s27
      %p24 = scmp.ge.s32.totalorder %s23, 4
      %s30 = sphi 0, %s42
      %s31 = sphi 0, %s38
      %s32 = sphi 0, %s30
      %s33 = sphi 0, %s31
      %s34 = sphi 0, %s32
      %s35 = sphi 0, %s33
      %s51 = sphi 0, %s53
      %s54 = sphi 0, %s51
      %s55 = sphi 0, %s54
      %s71 = sphi 0, %s55
      %s83 = sphi 0, %s85
      %s86 = sphi 0, %s83
      %s87 = sphi 0, %s86
      %s103 = sphi 0, %s87
      %s109 = sphi 0, %s111
      %s112 = sphi 0, %s109
      %s113 = sphi 0, %s112
      %s129 = sphi 0, %s113
      %s135 = sphi 0, %s137
      %s138 = sphi 0, %s135
      %s139 = sphi 0, %s138
      %s155 = sphi 0, %s139
      %s161 = sphi 0, %s163
      %s164 = sphi 0, %s161
      %s165 = sphi 0, %s164
      %s181 = sphi 0, %s165
    $region4: #{tpu_custom_call.1} parent=1 // loop_header_branch
      %26 = sbr.rel (%p24) target = $region8
    $region5: #{tpu_custom_call.1} parent=1 // loop_body
      %s28 = ssub.s32 %s23, 1
      %s29 = ssub.s32 %s23, 2
      %s36 = sadd.s32 1, %s31
      %p37 = scmp.ge.s32.totalorder %s36, 1
      %s38 = scalar_select %p37, 0, %s36
      %s39 = sadd.s32 1, %s30
      %s40 = scalar_select %p37, %s39, %s30
      %p41 = scmp.ge.s32.totalorder %s40, 2
      %s42 = scalar_select %p41, 0, %s40
      %s43 = sadd.s32 %s30, %s31
      %p44 = scmp.lt.s32.totalorder %s43, 0
      %s45 = scalar_select %p44, %s43, 0
      %s46 = sadd.s32 %s42, %s38
      %p47 = scmp.lt.s32.totalorder %s46, 0
      %s48 = scalar_select %p47, %s46, 0
      %s49 = ssub.s32 %s45, %s48
      %p50 = scmp.eq.s32.totalorder %s49, 0
      %s52 = sadd.s32 %s51, 1
      %s53 = scalar_select %p50, %s51, %s52
      %p56 = pneg %p50
      %p57 = scmp.eq.s32.totalorder %s23, 1
      %p58 = por %p56, %p57
      %p59 = scmp.ne.s32.totalorder %s51, %s54
      %p60 = scmp.eq.s32.totalorder %s23, 0
      %p61 = por %p59, %p60
      %p62 = scmp.ne.s32.totalorder %s51, %s54
      %p63 = scmp.eq.s32.totalorder %s28, 1
      %p64 = por %p62, %p63
      %p65 = scmp.ne.s32.totalorder %s54, %s55
      %p66 = scmp.eq.s32.totalorder %s28, 0
      %p67 = por %p65, %p66
      %p68 = scmp.ne.s32.totalorder %s54, %s55
      %p69 = scmp.eq.s32.totalorder %s29, 1
      %p70 = por %p68, %p69
      %p72 = scmp.ne.s32.totalorder %s55, %s71
      %p73 = scmp.eq.s32.totalorder %s29, 0
      %p74 = por %p72, %p73
      %s75 = sadd.s32 %s30, %s31
      %p76 = scmp.lt.s32.totalorder %s75, 0
      %s77 = scalar_select %p76, %s75, 0
      %s78 = sadd.s32 %s42, %s38
      %p79 = scmp.lt.s32.totalorder %s78, 0
      %s80 = scalar_select %p79, %s78, 0
      %s81 = ssub.s32 %s77, %s80
      %p82 = scmp.eq.s32.totalorder %s81, 0
      %s84 = sadd.s32 %s83, 1
      %s85 = scalar_select %p82, %s83, %s84
      %p88 = pneg %p82
      %p89 = scmp.eq.s32.totalorder %s23, 1
      %p90 = por %p88, %p89
      %p91 = scmp.ne.s32.totalorder %s83, %s86
      %p92 = scmp.eq.s32.totalorder %s23, 0
      %p93 = por %p91, %p92
      %p94 = scmp.ne.s32.totalorder %s83, %s86
      %p95 = scmp.eq.s32.totalorder %s28, 1
      %p96 = por %p94, %p95
      %p97 = scmp.ne.s32.totalorder %s86, %s87
      %p98 = scmp.eq.s32.totalorder %s28, 0
      %p99 = por %p97, %p98
      %p100 = scmp.ne.s32.totalorder %s86, %s87
      %p101 = scmp.eq.s32.totalorder %s29, 1
      %p102 = por %p100, %p101
      %p104 = scmp.ne.s32.totalorder %s87, %s103
      %p105 = scmp.eq.s32.totalorder %s29, 0
      %p106 = por %p104, %p105
      %s107 = ssub.s32 %s30, %s42
      %p108 = scmp.eq.s32.totalorder %s107, 0
      %s110 = sadd.s32 %s109, 1
      %s111 = scalar_select %p108, %s109, %s110
      %p114 = pneg %p108
      %p115 = scmp.eq.s32.totalorder %s23, 1
      %p116 = por %p114, %p115
      %p117 = scmp.ne.s32.totalorder %s109, %s112
      %p118 = scmp.eq.s32.totalorder %s23, 0
      %p119 = por %p117, %p118
      %p120 = scmp.ne.s32.totalorder %s109, %s112
      %p121 = scmp.eq.s32.totalorder %s28, 1
      %p122 = por %p120, %p121
      %p123 = scmp.ne.s32.totalorder %s112, %s113
      %p124 = scmp.eq.s32.totalorder %s28, 0
      %p125 = por %p123, %p124
      %p126 = scmp.ne.s32.totalorder %s112, %s113
      %p127 = scmp.eq.s32.totalorder %s29, 1
      %p128 = por %p126, %p127
      %p130 = scmp.ne.s32.totalorder %s113, %s129
      %p131 = scmp.eq.s32.totalorder %s29, 0
      %p132 = por %p130, %p131
      %s133 = ssub.s32 %s30, %s42
      %p134 = scmp.eq.s32.totalorder %s133, 0
      %s136 = sadd.s32 %s135, 1
      %s137 = scalar_select %p134, %s135, %s136
      %p140 = pneg %p134
      %p141 = scmp.eq.s32.totalorder %s23, 1
      %p142 = por %p140, %p141
      %p143 = scmp.ne.s32.totalorder %s135, %s138
      %p144 = scmp.eq.s32.totalorder %s23, 0
      %p145 = por %p143, %p144
      %p146 = scmp.ne.s32.totalorder %s135, %s138
      %p147 = scmp.eq.s32.totalorder %s28, 1
      %p148 = por %p146, %p147
      %p149 = scmp.ne.s32.totalorder %s138, %s139
      %p150 = scmp.eq.s32.totalorder %s28, 0
      %p151 = por %p149, %p150
      %p152 = scmp.ne.s32.totalorder %s138, %s139
      %p153 = scmp.eq.s32.totalorder %s29, 1
      %p154 = por %p152, %p153
      %p156 = scmp.ne.s32.totalorder %s139, %s155
      %p157 = scmp.eq.s32.totalorder %s29, 0
      %p158 = por %p156, %p157
      %s159 = ssub.s32 %s30, %s42
      %p160 = scmp.eq.s32.totalorder %s159, 0
      %s162 = sadd.s32 %s161, 1
      %s163 = scalar_select %p160, %s161, %s162
      %p166 = pneg %p160
      %p167 = scmp.eq.s32.totalorder %s23, 1
      %p168 = por %p166, %p167
      %p169 = scmp.ne.s32.totalorder %s161, %s164
      %p170 = scmp.eq.s32.totalorder %s23, 0
      %p171 = por %p169, %p170
      %p172 = scmp.ne.s32.totalorder %s161, %s164
      %p173 = scmp.eq.s32.totalorder %s28, 1
      %p174 = por %p172, %p173
      %p175 = scmp.ne.s32.totalorder %s164, %s165
      %p176 = scmp.eq.s32.totalorder %s28, 0
      %p177 = por %p175, %p176
      %p178 = scmp.ne.s32.totalorder %s164, %s165
      %p179 = scmp.eq.s32.totalorder %s29, 1
      %p180 = por %p178, %p179
      %p182 = scmp.ne.s32.totalorder %s165, %s181
      %p183 = scmp.eq.s32.totalorder %s29, 0
      %p184 = por %p182, %p183
      %p185 = scmp.le.s32.totalorder 1, %s23
      %p186 = scmp.lt.s32.totalorder %s23, 3
      %p187 = pnand %p185, %p186
      %p188 = pneg %p187
      // Predicated region
      $region9: #{tpu_custom_call.1} parent=5 // pred_check
        _
      $region10: #{tpu_custom_call.1} parent=5 // pred_check_branch
        %190 = sbr.rel (%p187) target = $region12
      $region11: #{tpu_custom_call.1} parent=5 // pred_region
        %s191 = ssub.s32 %s23, 1
      $region12: #{tpu_custom_call.1} parent=5 // pred_fallthru
        _
      %p192 = scmp.lt.s32.totalorder %s23, 2
      // Predicated region
      $region13: #{tpu_custom_call.1} parent=5 // pred_check
        %p193 = pneg %p192
      $region14: #{tpu_custom_call.1} parent=5 // pred_check_branch
        %195 = sbr.rel (%p193) target = $region16
      $region15: #{tpu_custom_call.1} parent=5 // pred_region
        // Predicated region
        $region17: #{tpu_custom_call.1} parent=15 // pred_check
          %p196 = pneg %p61
        $region18: #{tpu_custom_call.1} parent=15 // pred_check_branch
          %198 = sbr.rel (%p196) target = $region20
        $region19: #{tpu_custom_call.1} parent=15 // pred_region
          %s199 = sand.u32 %s51, 1
          %s200 = scalar_lea.sflag [#allocation3], %s199
          %s201 = sand.u32 %s51, 1
          %s202 = smul.addr %s201, 16
          %s203 = scalar_lea.vmem [#allocation2], %s202
          %s204 = sadd.s32 %s30, %s31
          %p205 = scmp.lt.s32.totalorder %s204, 0
          %s206 = scalar_select %p205, %s204, 0
          %s207 = smul.u32 2, %s206
          %209 = vsyncadd %s200, 0
          %s210 = smul.addr %s207, 8
          %s211 = scalar_lea.hbm %s0, %s210
          %s212 = sshll.u32 %s211, 4
          %s213 = int_to_ptr.hbm [resolvable:$true] %s212
          %s214 = sshll.u32 %s203, 4
          %s215 = int_to_ptr.vmem [resolvable:$true] %s214
          %220 = dma.hbm_to_vmem [thread:$0]  %s213, 256, %s215, %s200, 128, 128, 8
        $region20: #{tpu_custom_call.1} parent=15 // pred_fallthru
          _
        // Predicated region
        $region21: #{tpu_custom_call.1} parent=15 // pred_check
          %p221 = pneg %p93
        $region22: #{tpu_custom_call.1} parent=15 // pred_check_branch
          %223 = sbr.rel (%p221) target = $region24
        $region23: #{tpu_custom_call.1} parent=15 // pred_region
          %s224 = sand.u32 %s83, 1
          %s225 = scalar_lea.sflag [#allocation6], %s224
          %s226 = sand.u32 %s83, 1
          %s227 = smul.addr %s226, 16
          %s228 = scalar_lea.vmem [#allocation5], %s227
          %s229 = sadd.s32 %s30, %s31
          %p230 = scmp.lt.s32.totalorder %s229, 0
          %s231 = scalar_select %p230, %s229, 0
          %s232 = smul.u32 2, %s231
          %234 = vsyncadd %s225, 0
          %s235 = smul.addr %s232, 8
          %s236 = scalar_lea.hbm %s1, %s235
          %s237 = sshll.u32 %s236, 4
          %s238 = int_to_ptr.hbm [resolvable:$true] %s237
          %s239 = sshll.u32 %s228, 4
          %s240 = int_to_ptr.vmem [resolvable:$true] %s239
          %245 = dma.hbm_to_vmem [thread:$0]  %s238, 256, %s240, %s225, 128, 128, 8
        $region24: #{tpu_custom_call.1} parent=15 // pred_fallthru
          _
      $region16: #{tpu_custom_call.1} parent=5 // pred_fallthru
        _
      %p246 = scmp.le.s32.totalorder 1, %s23
      %p247 = scmp.lt.s32.totalorder %s23, 3
      %p248 = pnand %p246, %p247
      %p249 = pneg %p248
      // Predicated region
      $region25: #{tpu_custom_call.1} parent=5 // pred_check
        _
      $region26: #{tpu_custom_call.1} parent=5 // pred_check_branch
        %251 = sbr.rel (%p248) target = $region28
      $region27: #{tpu_custom_call.1} parent=5 // pred_region
        %s252 = ssub.s32 %s23, 1
        %s253 = sand.u32 %s54, 1
        %s254 = scalar_lea.sflag [#allocation3], %s253
        %s255 = sand.u32 %s54, 1
        %s256 = smul.addr %s255, 16
        %s257 = scalar_lea.vmem [#allocation2], %s256
        // Predicated region
        $region29: #{tpu_custom_call.1} parent=27 // pred_check
          %p258 = pneg %p67
        $region30: #{tpu_custom_call.1} parent=27 // pred_check_branch
          %260 = sbr.rel (%p258) target = $region32
        $region31: #{tpu_custom_call.1} parent=27 // pred_region
          %262 = dma.done %s254, 256
        $region32: #{tpu_custom_call.1} parent=27 // pred_fallthru
          _
        %s263 = sand.u32 %s86, 1
        %s264 = scalar_lea.sflag [#allocation6], %s263
        %s265 = sand.u32 %s86, 1
        %s266 = smul.addr %s265, 16
        %s267 = scalar_lea.vmem [#allocation5], %s266
        // Predicated region
        $region33: #{tpu_custom_call.1} parent=27 // pred_check
          %p268 = pneg %p99
        $region34: #{tpu_custom_call.1} parent=27 // pred_check_branch
          %270 = sbr.rel (%p268) target = $region36
        $region35: #{tpu_custom_call.1} parent=27 // pred_region
          %272 = dma.done %s264, 256
        $region36: #{tpu_custom_call.1} parent=27 // pred_fallthru
          _
        %s273 = sand.u32 %s54, 1
        %s274 = scalar_lea.sflag [#allocation3], %s273
        %s275 = sand.u32 %s54, 1
        %s276 = smul.addr %s275, 16
        %s277 = scalar_lea.vmem [#allocation2], %s276
        %p278 = pneg %p67
        %p279 = pneg %p64
        %s280 = sand.u32 %s86, 1
        %s281 = scalar_lea.sflag [#allocation6], %s280
        %s282 = sand.u32 %s86, 1
        %s283 = smul.addr %s282, 16
        %s284 = scalar_lea.vmem [#allocation5], %s283
        %p285 = pneg %p99
        %p286 = pneg %p96
        %p287 = pneg %p125
        %p288 = pneg %p122
        %s289 = sand.u32 %s112, 1
        %s290 = scalar_lea.sflag [#allocation4], %s289
        %s291 = sand.u32 %s112, 1
        %s292 = smul.addr %s291, 8
        %s293 = scalar_lea.vmem [#allocation7], %s292
        %p294 = pneg %p151
        %p295 = pneg %p148
        %s296 = sand.u32 %s28, 1
        %s297 = scalar_lea.sflag [#allocation9], %s296
        %s298 = sand.u32 %s138, 1
        %s299 = smul.addr %s298, 8
        %s300 = scalar_lea.vmem [#allocation8], %s299
        %p301 = pneg %p177
        %p302 = pneg %p174
        %s303 = sand.u32 %s28, 1
        %s304 = scalar_lea.sflag [#allocation9], %s303
        %s305 = sand.u32 %s164, 1
        %s306 = smul.addr %s305, 8
        %s307 = scalar_lea.vmem [#allocation10], %s306
        %s308 = sadd.s32 %s32, %s33
        %p309 = scmp.lt.s32.totalorder %s308, 0
        %s310 = scalar_select %p309, %s308, 0
        %s311 = smul.u32 2, %s310
        %s312 = sadd.s32 %s32, %s33
        %p313 = scmp.lt.s32.totalorder %s312, 0
        %s314 = scalar_select %p313, %s312, 0
        %s315 = smul.u32 2, %s314
        %p316 = scmp.eq.s32.totalorder %s33, 0
        // Predicated region
        $region37: #{tpu_custom_call.1} parent=27 // pred_check
          %p317 = pneg %p316
        $region38: #{tpu_custom_call.1} parent=27 // pred_check_branch
          %319 = sbr.rel (%p317) target = $region40
        $region39: #{tpu_custom_call.1} parent=27 // pred_region
          %320 = vst [vmem:[%s293] sm:$0xff] 0.0
          %321 = vst [vmem:[%s300] sm:$0xff] 0.0
          %322 = vst [vmem:[%s307] sm:$0xff] 0.0
        $region40: #{tpu_custom_call.1} parent=27 // pred_fallthru
          _
        %v323 = vld [vmem:[%s257] sm:$0xff]
        %v324 = vld [vmem:[%s257 + $0x8] sm:$0xff]
        %v325 = vld [vmem:[%s267] sm:$0xff]
        %v326 = vld [vmem:[%s267 + $0x8] sm:$0xff]
        %s327 = sadd.s32 %s32, %s33
        %v328 = vlaneseq
        %v329 = vshrl.u32 %v328, 7
        %v330 = vadd.s32 %v329, 8
        %v331 = vlaneseq
        %v332 = vand.u32 %v331, 127
        %s333 = smul.u32 %s327, 16
        %v334 = vstv %s333
        %v335 = vadd.s32 %v334, %v329
        %v336 = vadd.s32 %v334, %v330
        %v337 = vmul.u32 %v335, 128
        %v338 = vmul.u32 %v336, 128
        %v339 = vadd.s32 %v337, %v332
        %v340 = vadd.s32 %v338, %v332
        %vm341 = vcmp.lt.s32.totalorder %v339, 2048
        %vm342 = vcmp.lt.s32.totalorder %v340, 2048
        %v343 = vsel %vm341, 1, 0
        %v344 = vsel %vm342, 1, 0
        %v345 = vcvt.s32.f32 %v343
        %v346 = vcvt.s32.f32 %v344
        %v347 = vsel %vm341, %v323, 0.5
        %v348 = vsel %vm342, %v324, 0.5
        %v349 = vsel %vm341, %v325, 0.0
        %v350 = vsel %vm342, %v326, 0.0
        %vm351 = vcmp.eq.f32.partialorder %v349, 1.0
        %vm352 = vcmp.eq.f32.partialorder %v350, 1.0
        %v353 = vsel %vm351, 1, 0
        %v354 = vsel %vm352, 1, 0
        %v355 = vcvt.s32.f32 %v353
        %v356 = vcvt.s32.f32 %v354
        %v357 = vmul.f32 %v355, %v345
        %v358 = vmul.f32 %v356, %v346
        %vm359 = vcmp.lt.f32.partialorder %v349, 1.0
        %vm360 = vcmp.lt.f32.partialorder %v350, 1.0
        %v361 = vsel %vm359, 1, 0
        %v362 = vsel %vm360, 1, 0
        %v363 = vcvt.s32.f32 %v361
        %v364 = vcvt.s32.f32 %v362
        %v365 = vmul.f32 %v363, %v345
        %v366 = vmul.f32 %v364, %v346
        %v367 = vmax.f32 %v347, 1e-12
        %v368 = vmax.f32 %v348, 1e-12
        %v369 = vsub.f32 1.0, %v349
        %v370 = vsub.f32 1.0, %v350
        %v371 = vmul.f32 %v369, %v369
        %v372 = vmul.f32 %v370, %v370
        %v373 = vmul.f32 %v371, %v371
        %v374 = vmul.f32 %v372, %v372
        %v375 = vsub.f32 1.0, %v367
        %v376 = vsub.f32 1.0, %v368
        %v377 = vmul.f32 %v375, %v375
        %v378 = vmul.f32 %v376, %v376
        %v379 = vmul.f32 %v367, %v367
        %v380 = vmul.f32 %v368, %v368
        %v381 = vlog2.pop %v367
        %v382 = vmul.f32 %v381, 0.6931472
        %v383 = vlog2.pop %v368
        %v384 = vmul.f32 %v383, 0.6931472
        %v385 = vmul.f32 %v382, %v377
        %v386 = vmul.f32 %v384, %v378
        %v387 = vmul.f32 %v385, %v357
        %v388 = vmul.f32 %v386, %v358
        %v389 = vadd.f32 %v375, 1e-05
        %v390 = vadd.f32 %v376, 1e-05
        %v391 = vlog2.pop %v389
        %v392 = vmul.f32 %v391, 0.6931472
        %v393 = vlog2.pop %v390
        %v394 = vmul.f32 %v393, 0.6931472
        %v395 = vmul.f32 %v392, %v379
        %v396 = vmul.f32 %v394, %v380
        %v397 = vmul.f32 %v395, %v373
        %v398 = vmul.f32 %v396, %v374
        %v399 = vmul.f32 %v397, %v365
        %v400 = vmul.f32 %v398, %v366
        %v401 = vld [vmem:[%s293] sm:$0xff]
        %v402 = vadd.f32 %v387, %v388
        %v403 = vadd.f32 %v401, %v402
        %404 = vst [vmem:[%s293] sm:$0xff] %v403
        %v405 = vld [vmem:[%s300] sm:$0xff]
        %v406 = vadd.f32 %v399, %v400
        %v407 = vadd.f32 %v405, %v406
        %408 = vst [vmem:[%s300] sm:$0xff] %v407
        %v409 = vld [vmem:[%s307] sm:$0xff]
        %v410 = vadd.f32 %v357, %v358
        %v411 = vadd.f32 %v409, %v410
        %412 = vst [vmem:[%s307] sm:$0xff] %v411
        %s413 = sand.u32 %s112, 1
        %s414 = scalar_lea.sflag [#allocation4], %s413
        %s415 = sand.u32 %s112, 1
        %s416 = smul.addr %s415, 8
        %s417 = scalar_lea.vmem [#allocation7], %s416
        %s418 = sand.u32 %s28, 1
        %s419 = scalar_lea.sflag [#allocation9], %s418
        %s420 = sand.u32 %s138, 1
        %s421 = smul.addr %s420, 8
        %s422 = scalar_lea.vmem [#allocation8], %s421
        %s423 = sand.u32 %s28, 1
        %s424 = scalar_lea.sflag [#allocation9], %s423
        %s425 = sand.u32 %s164, 1
        %s426 = smul.addr %s425, 8
        %s427 = scalar_lea.vmem [#allocation10], %s426
        // Predicated region
        $region41: #{tpu_custom_call.1} parent=27 // pred_check
          %p428 = pneg %p122
        $region42: #{tpu_custom_call.1} parent=27 // pred_check_branch
          %430 = sbr.rel (%p428) target = $region44
        $region43: #{tpu_custom_call.1} parent=27 // pred_region
          %432 = vsyncadd %s414, 0
          %s433 = smul.addr %s32, 8
          %s434 = scalar_lea.hbm %s2, %s433
          %s436 = sshll.u32 %s417, 4
          %s437 = int_to_ptr.vmem [resolvable:$true] %s436
          %s438 = sshll.u32 %s434, 4
          %s439 = int_to_ptr.hbm [resolvable:$true] %s438
          %441 = dma.vmem_to_hbm [thread:$0]  %s437, 128, %s439, %s414
        $region44: #{tpu_custom_call.1} parent=27 // pred_fallthru
          _
        // Predicated region
        $region45: #{tpu_custom_call.1} parent=27 // pred_check
          %p442 = pneg %p148
        $region46: #{tpu_custom_call.1} parent=27 // pred_check_branch
          %444 = sbr.rel (%p442) target = $region48
        $region47: #{tpu_custom_call.1} parent=27 // pred_region
          %446 = vsyncadd %s419, 0
          %s447 = smul.addr %s32, 8
          %s448 = scalar_lea.hbm %s3, %s447
          %s450 = sshll.u32 %s422, 4
          %s451 = int_to_ptr.vmem [resolvable:$true] %s450
          %s452 = sshll.u32 %s448, 4
          %s453 = int_to_ptr.hbm [resolvable:$true] %s452
          %455 = dma.vmem_to_hbm [thread:$0]  %s451, 128, %s453, %s419
        $region48: #{tpu_custom_call.1} parent=27 // pred_fallthru
          _
        // Predicated region
        $region49: #{tpu_custom_call.1} parent=27 // pred_check
          %p456 = pneg %p174
        $region50: #{tpu_custom_call.1} parent=27 // pred_check_branch
          %458 = sbr.rel (%p456) target = $region52
        $region51: #{tpu_custom_call.1} parent=27 // pred_region
          %460 = vsyncadd %s424, 0
          %s461 = smul.addr %s32, 8
          %s462 = scalar_lea.hbm %s4, %s461
          %s464 = sshll.u32 %s427, 4
          %s465 = int_to_ptr.vmem [resolvable:$true] %s464
          %s466 = sshll.u32 %s462, 4
          %s467 = int_to_ptr.hbm [resolvable:$true] %s466
          %469 = dma.vmem_to_hbm [thread:$0]  %s465, 128, %s467, %s424
        $region52: #{tpu_custom_call.1} parent=27 // pred_fallthru
          _
      $region28: #{tpu_custom_call.1} parent=5 // pred_fallthru
        _
      %p470 = scmp.le.s32.totalorder 2, %s23
      // Predicated region
      $region53: #{tpu_custom_call.1} parent=5 // pred_check
        %p471 = pneg %p470
      $region54: #{tpu_custom_call.1} parent=5 // pred_check_branch
        %473 = sbr.rel (%p471) target = $region56
      $region55: #{tpu_custom_call.1} parent=5 // pred_region
        %s474 = ssub.s32 %s23, 2
        // Predicated region
        $region57: #{tpu_custom_call.1} parent=55 // pred_check
          %p475 = pneg %p128
        $region58: #{tpu_custom_call.1} parent=55 // pred_check_branch
          %477 = sbr.rel (%p475) target = $region60
        $region59: #{tpu_custom_call.1} parent=55 // pred_region
          %s478 = sand.u32 %s113, 1
          %s479 = scalar_lea.sflag [#allocation4], %s478
          %s480 = sand.u32 %s113, 1
          %s481 = smul.addr %s480, 8
          %s482 = scalar_lea.vmem [#allocation7], %s481
          %484 = dma.done %s479, 128
        $region60: #{tpu_custom_call.1} parent=55 // pred_fallthru
          _
        // Predicated region
        $region61: #{tpu_custom_call.1} parent=55 // pred_check
          %p485 = pneg %p154
        $region62: #{tpu_custom_call.1} parent=55 // pred_check_branch
          %487 = sbr.rel (%p485) target = $region64
        $region63: #{tpu_custom_call.1} parent=55 // pred_region
          %s488 = sand.u32 %s29, 1
          %s489 = scalar_lea.sflag [#allocation9], %s488
          %s490 = sand.u32 %s139, 1
          %s491 = smul.addr %s490, 8
          %s492 = scalar_lea.vmem [#allocation8], %s491
          %494 = dma.done %s489, 128
        $region64: #{tpu_custom_call.1} parent=55 // pred_fallthru
          _
        // Predicated region
        $region65: #{tpu_custom_call.1} parent=55 // pred_check
          %p495 = pneg %p180
        $region66: #{tpu_custom_call.1} parent=55 // pred_check_branch
          %497 = sbr.rel (%p495) target = $region68
        $region67: #{tpu_custom_call.1} parent=55 // pred_region
          %s498 = sand.u32 %s29, 1
          %s499 = scalar_lea.sflag [#allocation9], %s498
          %s500 = sand.u32 %s165, 1
          %s501 = smul.addr %s500, 8
          %s502 = scalar_lea.vmem [#allocation10], %s501
          %504 = dma.done %s499, 128
        $region68: #{tpu_custom_call.1} parent=55 // pred_fallthru
          _
      $region56: #{tpu_custom_call.1} parent=5 // pred_fallthru
        _
    $region6: #{tpu_custom_call.1} parent=1 // loop_footer
      %s27 = sadd.s32 1, %s23
    $region7: #{tpu_custom_call.1} parent=1 // loop_footer_branch
      %22 = sbr.rel target = $region3
    $region8: #{tpu_custom_call.1} parent=1 // loop_exit
      _
    %505 = vsyncpa [#allocation3], 1
    %s506 = scalar_lea.sflag [#allocation3], 1
    %507 = vsyncpa %s506, 1
    %508 = vsyncpa [#allocation6], 1
    %s509 = scalar_lea.sflag [#allocation6], 1
    %510 = vsyncpa %s509, 1
    %511 = vsyncpa [#allocation4], 1
    %s512 = scalar_lea.sflag [#allocation4], 1
    %513 = vsyncpa %s512, 1
    %514 = vsyncpa [#allocation9], 1
    %s515 = scalar_lea.sflag [#allocation9], 1
    %516 = vsyncpa %s515, 1

</llo_original>
